<compile_context>
chip_gen: v7x
topology: tpu7x:2x2x1
jax: 0.10.0
libtpu: 0.0.40
codegen_flags: <defaults>
</compile_context>

<pallas_src>
import functools

import jax
import jax.numpy as jnp
from jax.experimental import pallas as pl
from jax.experimental.pallas import tpu as pltpu


def _var_mask_kernel(x_ref, w_ref, bias_ref, out_ref, *, output_fun):
    # x_ref:    (TB, w*m)  -- one batch tile of flattened inputs (streamed)
    # w_ref:    (w*m, m)   -- precomputed masked_adj (resident across grid steps)
    # bias_ref: (1, m)     -- resident
    # out_ref:  (TB, m)
    acc = jnp.dot(x_ref[...], w_ref[...],
                  preferred_element_type=jnp.float32)        # MXU matmul, f32 acc
    acc = acc + bias_ref[...]                                 # broadcast over TB
    if output_fun == "sigmoid":
        acc = jax.nn.sigmoid(acc)
    elif output_fun == "tanh":
        acc = jnp.tanh(acc)
    # output_fun is None -> identity
    out_ref[...] = acc.astype(out_ref.dtype)


def _round_up(v, k):
    return ((v + k - 1) // k) * k


def var_mask_forward(x, adj, mask_mat, bias, *, output_fun="sigmoid", block_b=2048):
    """x: (B, w, m); adj: (m, m); mask_mat: (w, m, m); bias: (m,)."""
    B, w, m = x.shape
    assert adj.shape == (m, m) and mask_mat.shape == (w, m, m) and bias.shape == (m,)
    assert output_fun in ("sigmoid", "tanh", None)
    K = w * m

    # Tiny weight-side precompute (a few KB) done once in plain XLA: hoists the
    # adj-broadcast + mask multiply out of every grid step.
    masked_adj = (adj[None, :, :] * mask_mat).reshape(K, m)

    # Pure layout glue (free reshapes of existing arrays).
    x_flat = x.reshape(B, K)
    bias_2d = bias.reshape(1, m)

    # Batch tile: multiple of 8 (f32 sublane), capped at block_b, and also capped
    # at ~half the batch so the grid has >= 2 parallel steps (lets v7x split the
    # batch axis across its two TensorCores).  No padding of x: the ragged last
    # block is handled by Pallas (dropped stores for OOB rows).
    TB = max(8, min(block_b, _round_up(pl.cdiv(B, 2), 8)))
    grid = (pl.cdiv(B, TB),)

    kernel = functools.partial(_var_mask_kernel, output_fun=output_fun)

    cost = pl.CostEstimate(
        flops=2 * B * K * m,
        transcendentals=(B * m) if output_fun in ("sigmoid", "tanh") else 0,
        bytes_accessed=(B * K + B * m + K * m + m) * 4,
    )

    out = pl.pallas_call(
        kernel,
        out_shape=jax.ShapeDtypeStruct((B, m), x.dtype),
        grid=grid,
        in_specs=[
            pl.BlockSpec((TB, K), lambda i: (i, 0)),   # x streams per batch tile
            pl.BlockSpec((K, m), lambda i: (0, 0)),    # masked_adj: resident
            pl.BlockSpec((1, m), lambda i: (0, 0)),    # bias: resident
        ],
        out_specs=pl.BlockSpec((TB, m), lambda i: (i, 0)),
        compiler_params=pltpu.CompilerParams(
            # Batch tiles are independent -> megacore split on v7x.
            dimension_semantics=("parallel",),
        ),
        cost_estimate=cost,
    )(x_flat, masked_adj, bias_2d)
    return out


def _reference(x, adj, mask_mat, bias, output_fun="sigmoid"):
    B, w, m = x.shape
    masked_adj = (adj[None, :, :] * mask_mat).reshape(w * m, m)
    y = x.reshape(B, w * m) @ masked_adj + bias
    if output_fun == "sigmoid":
        y = jax.nn.sigmoid(y)
    elif output_fun == "tanh":
        y = jnp.tanh(y)
    return y


if __name__ == "__main__":
    # Small shapes consistent with the module: batch=200 (ragged vs the batch
    # tile, exercises the dropped-store path), window w=8, num_series m=16.
    B, w, m = 200, 8, 16
    key = jax.random.PRNGKey(0)
    k_x, k_adj, k_mask = jax.random.split(key, 3)

    x = jax.random.normal(k_x, (B, w, m), dtype=jnp.float32)
    adj = (jax.random.uniform(k_adj, (m, m)) > 0.5).astype(jnp.float32)

    # Deterministic parameter init (xavier_normal for mask_mat, zeros for bias).
    fan_in, fan_out = m, m
    std = (2.0 / (fan_in + fan_out)) ** 0.5
    mask_mat = std * jax.random.normal(k_mask, (w, m, m), dtype=jnp.float32)
    bias = jnp.zeros((m,), dtype=jnp.float32)

    out = var_mask_forward(x, adj, mask_mat, bias, output_fun="sigmoid")
    out = jax.block_until_ready(out)

    ref = _reference(x, adj, mask_mat, bias, output_fun="sigmoid")
    assert out.shape == (B, m)
    assert jnp.allclose(out, ref, atol=1e-5, rtol=1e-5), "mismatch vs reference"

    print("KERNEL_OK")
</pallas_src>

<mosaic_0001>
module attributes {stable_mosaic.version = 11 : i64} {
  func.func @_var_mask_kernel(%arg0: i32, %arg1: memref<104x128xf32, #tpu.memory_space<vmem>>, %arg2: memref<128x16xf32, #tpu.memory_space<vmem>>, %arg3: memref<1x16xf32, #tpu.memory_space<vmem>>, %arg4: memref<104x16xf32, #tpu.memory_space<vmem>>) attributes {dimension_semantics = [#tpu.dimension_semantics<parallel>], iteration_bounds = array<i64: 2>, scalar_prefetch = 0 : i64, scratch_operands = 0 : i64, tpu.core_type = #tpu.core_type<tc>, window_params = [{transform_indices = @transform_0, window_bounds = array<i64: 104, 128>}, {pipeline_mode = #tpu.pipeline_mode<synchronous>, transform_indices = @transform_1, window_bounds = array<i64: 128, 16>}, {pipeline_mode = #tpu.pipeline_mode<synchronous>, transform_indices = @transform_2, window_bounds = array<i64: 1, 16>}, {transform_indices = @transform_3, window_bounds = array<i64: 104, 16>}]} {
    %c0 = arith.constant 0 : index
    %c0_0 = arith.constant 0 : index
    %0 = vector.load %arg1[%c0, %c0_0] : memref<104x128xf32, #tpu.memory_space<vmem>>, vector<104x128xf32>
    %c0_1 = arith.constant 0 : index
    %c0_2 = arith.constant 0 : index
    %1 = vector.load %arg2[%c0_1, %c0_2] : memref<128x16xf32, #tpu.memory_space<vmem>>, vector<128x16xf32>
    %cst = arith.constant dense<0.000000e+00> : vector<104x16xf32>
    %2 = tpu.matmul %0, %1, %cst {dimension_numbers = #tpu.dot_dimension_numbers<[1], [0], [0], [1], [0, 0, 1, 1], [], []>} : vector<104x128xf32>, vector<128x16xf32>, vector<104x16xf32> -> vector<104x16xf32>
    %c0_3 = arith.constant 0 : index
    %c0_4 = arith.constant 0 : index
    %3 = vector.load %arg3[%c0_3, %c0_4] : memref<1x16xf32, #tpu.memory_space<vmem>>, vector<1x16xf32>
    %4 = vector.broadcast %3 : vector<1x16xf32> to vector<104x16xf32>
    %5 = arith.addf %2, %4 : vector<104x16xf32>
    %6 = arith.negf %5 : vector<104x16xf32>
    %7 = math.exp %6 : vector<104x16xf32>
    %cst_5 = arith.constant 1.000000e+00 : f32
    %8 = vector.broadcast %cst_5 : f32 to vector<104x16xf32>
    %9 = arith.addf %8, %7 : vector<104x16xf32>
    %10 = arith.divf %8, %9 : vector<104x16xf32>
    %c0_6 = arith.constant 0 : index
    %c0_7 = arith.constant 0 : index
    %11 = vector.load %arg4[%c0_6, %c0_7] : memref<104x16xf32, #tpu.memory_space<vmem>>, vector<104x16xf32>
    tpu.vector_store %arg4[%c0_6, %c0_7], %10 {strides = array<i32>} : memref<104x16xf32, #tpu.memory_space<vmem>>, vector<104x16xf32>,
    return
  }
  func.func @transform_0(%arg0: i32) -> (i32, i32) {
    %c0_i32 = arith.constant 0 : i32
    %c0_i32_0 = arith.constant 0 : i32
    return %arg0, %c0_i32 : i32, i32
  }
  func.func @transform_1(%arg0: i32) -> (i32, i32) {
    %c0_i32 = arith.constant 0 : i32
    %c0_i32_0 = arith.constant 0 : i32
    %c0_i32_1 = arith.constant 0 : i32
    return %c0_i32, %c0_i32_0 : i32, i32
  }
  func.func @transform_2(%arg0: i32) -> (i32, i32) {
    %c0_i32 = arith.constant 0 : i32
    %c0_i32_0 = arith.constant 0 : i32
    %c0_i32_1 = arith.constant 0 : i32
    return %c0_i32, %c0_i32_0 : i32, i32
  }
  func.func @transform_3(%arg0: i32) -> (i32, i32) {
    %c0_i32 = arith.constant 0 : i32
    %c0_i32_0 = arith.constant 0 : i32
    return %arg0, %c0_i32 : i32, i32
  }
}

</mosaic_0001>

<llo_original>
// kernel: tpu_custom_call.1
$region0: #{tpu_custom_call.1}
  #allocation0 [shape = 'u32[]', space=smem, size = 0x4, offset = 0x4, fixed_abs, tag = 'smem constant byte address 0x4 - core index']
  #allocation1 [shape = 'u32[144,128]{1,0:T(1,128)}', space=vmem, size = 0x12000, scoped, tag = 'internal scratch']
  %s0 = inlined_call_operand.hbm [shape: f32[200,128], index: 0, kind: input, shape index: {}]
  %s1 = inlined_call_operand.vmem [shape: f32[128,16], index: 1, kind: input, shape index: {}]
  %s2 = inlined_call_operand.vmem [shape: f32[1,16], index: 2, kind: input, shape index: {}]
  %s3 = inlined_call_operand.vmem [shape: f32[200,16], index: 3, kind: output, shape index: {}]
  %s4 = sld [smem:[#allocation0]]
  $region97: #{tpu_custom_call.1} parent=0
    _
  %s6 = ssub.s32 1, %s4
  %s7 = scalar_select 0, %s6, %s4
  $region1: #{tpu_custom_call.1} parent=0
    #allocation2 [shape = 'u8[106496]{0}', space=vmem, size = 0x1a000, scoped, tag = 'input window, operand 0']
    #allocation3 [shape = 's32[2]{0}', space=sflag, size = 0x8, scoped, tag = 'scoped memory for tpu_custom_call.1']
    #allocation4 [shape = 'u8[106496]{0}', space=vmem, size = 0x1a000, scoped, tag = 'output window, operand 0']
    %8 = vsyncpa [#allocation3], 0
    %s9 = scalar_lea.sflag [#allocation3], 1
    %10 = vsyncpa %s9, 0
    loop: start=0, step=1, limit=4
    $region2: #{tpu_custom_call.1} parent=1 // loop_pre_header
      _
    $region3: #{tpu_custom_call.1} parent=1 // loop_header
      %s12 = sphi 0, %s16
      %p13 = scmp.ge.s32.totalorder %s12, 4
      %s22 = sphi 0, %s24
      %s25 = sphi 0, %s22
      %s26 = sphi 0, %s25
      %s42 = sphi 0, %s26
      %s46 = sphi 0, %s46
      %s48 = sphi 0, %s46
      %s49 = sphi 0, %s48
      %s63 = sphi 0, %s49
      %s67 = sphi 0, %s67
      %s69 = sphi 0, %s67
      %s70 = sphi 0, %s69
      %s84 = sphi 0, %s70
      %s90 = sphi 0, %s92
      %s93 = sphi 0, %s90
      %s94 = sphi 0, %s93
      %s110 = sphi 0, %s94
    $region4: #{tpu_custom_call.1} parent=1 // loop_header_branch
      %15 = sbr.rel (%p13) target = $region8
    $region5: #{tpu_custom_call.1} parent=1 // loop_body
      %s17 = ssub.s32 %s12, 1
      %s18 = ssub.s32 %s12, 2
      %s19 = sadd.s32 %s12, 1
      %s20 = ssub.s32 %s12, %s19
      %p21 = scmp.eq.s32.totalorder %s20, 0
      %s23 = sadd.s32 %s22, 1
      %s24 = scalar_select %p21, %s22, %s23
      %p27 = pneg %p21
      %p28 = scmp.eq.s32.totalorder %s12, 1
      %p29 = por %p27, %p28
      %p30 = scmp.ne.s32.totalorder %s22, %s25
      %p31 = scmp.eq.s32.totalorder %s12, 0
      %p32 = por %p30, %p31
      %p33 = scmp.ne.s32.totalorder %s22, %s25
      %p34 = scmp.eq.s32.totalorder %s17, 1
      %p35 = por %p33, %p34
      %p36 = scmp.ne.s32.totalorder %s25, %s26
      %p37 = scmp.eq.s32.totalorder %s17, 0
      %p38 = por %p36, %p37
      %p39 = scmp.ne.s32.totalorder %s25, %s26
      %p40 = scmp.eq.s32.totalorder %s18, 1
      %p41 = por %p39, %p40
      %p43 = scmp.ne.s32.totalorder %s26, %s42
      %p44 = scmp.eq.s32.totalorder %s18, 0
      %p45 = por %p43, %p44
      %s47 = sadd.s32 %s46, 1
      %p50 = scmp.eq.s32.totalorder %s12, 1
      %p51 = scmp.ne.s32.totalorder %s46, %s48
      %p52 = scmp.eq.s32.totalorder %s12, 0
      %p53 = por %p51, %p52
      %p54 = scmp.ne.s32.totalorder %s46, %s48
      %p55 = scmp.eq.s32.totalorder %s17, 1
      %p56 = por %p54, %p55
      %p57 = scmp.ne.s32.totalorder %s48, %s49
      %p58 = scmp.eq.s32.totalorder %s17, 0
      %p59 = por %p57, %p58
      %p60 = scmp.ne.s32.totalorder %s48, %s49
      %p61 = scmp.eq.s32.totalorder %s18, 1
      %p62 = por %p60, %p61
      %p64 = scmp.ne.s32.totalorder %s49, %s63
      %p65 = scmp.eq.s32.totalorder %s18, 0
      %p66 = por %p64, %p65
      %s68 = sadd.s32 %s67, 1
      %p71 = scmp.eq.s32.totalorder %s12, 1
      %p72 = scmp.ne.s32.totalorder %s67, %s69
      %p73 = scmp.eq.s32.totalorder %s12, 0
      %p74 = por %p72, %p73
      %p75 = scmp.ne.s32.totalorder %s67, %s69
      %p76 = scmp.eq.s32.totalorder %s17, 1
      %p77 = por %p75, %p76
      %p78 = scmp.ne.s32.totalorder %s69, %s70
      %p79 = scmp.eq.s32.totalorder %s17, 0
      %p80 = por %p78, %p79
      %p81 = scmp.ne.s32.totalorder %s69, %s70
      %p82 = scmp.eq.s32.totalorder %s18, 1
      %p83 = por %p81, %p82
      %p85 = scmp.ne.s32.totalorder %s70, %s84
      %p86 = scmp.eq.s32.totalorder %s18, 0
      %p87 = por %p85, %p86
      %s88 = ssub.s32 %s12, %s19
      %p89 = scmp.eq.s32.totalorder %s88, 0
      %s91 = sadd.s32 %s90, 1
      %s92 = scalar_select %p89, %s90, %s91
      %p95 = pneg %p89
      %p96 = scmp.eq.s32.totalorder %s12, 1
      %p97 = por %p95, %p96
      %p98 = scmp.ne.s32.totalorder %s90, %s93
      %p99 = scmp.eq.s32.totalorder %s12, 0
      %p100 = por %p98, %p99
      %p101 = scmp.ne.s32.totalorder %s90, %s93
      %p102 = scmp.eq.s32.totalorder %s17, 1
      %p103 = por %p101, %p102
      %p104 = scmp.ne.s32.totalorder %s93, %s94
      %p105 = scmp.eq.s32.totalorder %s17, 0
      %p106 = por %p104, %p105
      %p107 = scmp.ne.s32.totalorder %s93, %s94
      %p108 = scmp.eq.s32.totalorder %s18, 1
      %p109 = por %p107, %p108
      %p111 = scmp.ne.s32.totalorder %s94, %s110
      %p112 = scmp.eq.s32.totalorder %s18, 0
      %p113 = por %p111, %p112
      %p114 = scmp.le.s32.totalorder 1, %s12
      %p115 = scmp.lt.s32.totalorder %s12, 3
      %p116 = pnand %p114, %p115
      %p117 = pneg %p116
      // Predicated region
      $region9: #{tpu_custom_call.1} parent=5 // pred_check
        _
      $region10: #{tpu_custom_call.1} parent=5 // pred_check_branch
        %119 = sbr.rel (%p116) target = $region12
      $region11: #{tpu_custom_call.1} parent=5 // pred_region
        %s120 = ssub.s32 %s12, 1
        // Predicated region
        $region13: #{tpu_custom_call.1} parent=11 // pred_check
          %p121 = pneg %p59
        $region14: #{tpu_custom_call.1} parent=11 // pred_check_branch
          %123 = sbr.rel (%p121) target = $region16
        $region15: #{tpu_custom_call.1} parent=11 // pred_region
          _
        $region16: #{tpu_custom_call.1} parent=11 // pred_fallthru
          _
        // Predicated region
        $region17: #{tpu_custom_call.1} parent=11 // pred_check
          %p124 = pneg %p80
        $region18: #{tpu_custom_call.1} parent=11 // pred_check_branch
          %126 = sbr.rel (%p124) target = $region20
        $region19: #{tpu_custom_call.1} parent=11 // pred_region
          _
        $region20: #{tpu_custom_call.1} parent=11 // pred_fallthru
          _
      $region12: #{tpu_custom_call.1} parent=5 // pred_fallthru
        _
      %p127 = scmp.lt.s32.totalorder %s12, 2
      // Predicated region
      $region21: #{tpu_custom_call.1} parent=5 // pred_check
        %p128 = pneg %p127
      $region22: #{tpu_custom_call.1} parent=5 // pred_check_branch
        %130 = sbr.rel (%p128) target = $region24
      $region23: #{tpu_custom_call.1} parent=5 // pred_region
        // Predicated region
        $region25: #{tpu_custom_call.1} parent=23 // pred_check
          %p131 = pneg %p32
        $region26: #{tpu_custom_call.1} parent=23 // pred_check_branch
          %133 = sbr.rel (%p131) target = $region28
        $region27: #{tpu_custom_call.1} parent=23 // pred_region
          %s134 = sand.u32 %s22, 1
          %s135 = scalar_lea.sflag [#allocation3], %s134
          %s136 = sand.u32 %s22, 1
          %s137 = smul.addr %s136, 104
          %s138 = scalar_lea.vmem [#allocation2], %s137
          %s139 = smul.u32 13, %s12
          %s140 = ssub.s32 25, %s139
          %p141 = scmp.lt.s32.totalorder %s140, 13
          %s142 = scalar_select %p141, %s140, 13
          %s143 = smul.u32 128, %s142
          %s145 = ssub.s32 1664, %s143
          %146 = vsyncadd %s135, %s145
          %p147 = scmp.ne.s32.totalorder 0, %s143
          %s148 = smul.addr %s139, 128
          %s149 = scalar_lea.hbm %s0, %s148
          %s150 = smul.u32 8, %s142
          %s151 = sshll.u32 %s138, 4
          %s152 = int_to_ptr.vmem [resolvable:$true] %s151
          %s153 = sshll.u32 %s150, 4
          %157 = dma.hbm_to_vmem [thread:$0]  (%p147), %s149, %s153, %s152, %s135, 128, 128, 8
        $region28: #{tpu_custom_call.1} parent=23 // pred_fallthru
          _
      $region24: #{tpu_custom_call.1} parent=5 // pred_fallthru
        _
      %p158 = scmp.le.s32.totalorder 1, %s12
      %p159 = scmp.lt.s32.totalorder %s12, 3
      %p160 = pnand %p158, %p159
      %p161 = pneg %p160
      // Predicated region
      $region29: #{tpu_custom_call.1} parent=5 // pred_check
        _
      $region30: #{tpu_custom_call.1} parent=5 // pred_check_branch
        %163 = sbr.rel (%p160) target = $region32
      $region31: #{tpu_custom_call.1} parent=5 // pred_region
        %s164 = ssub.s32 %s12, 1
        %s165 = sand.u32 %s25, 1
        %s166 = scalar_lea.sflag [#allocation3], %s165
        %s167 = sand.u32 %s25, 1
        %s168 = smul.addr %s167, 104
        %s169 = scalar_lea.vmem [#allocation2], %s168
        // Predicated region
        $region33: #{tpu_custom_call.1} parent=31 // pred_check
          %p170 = pneg %p38
        $region34: #{tpu_custom_call.1} parent=31 // pred_check_branch
          %172 = sbr.rel (%p170) target = $region36
        $region35: #{tpu_custom_call.1} parent=31 // pred_region
          %173 = dma.done %s166, 1664
        $region36: #{tpu_custom_call.1} parent=31 // pred_fallthru
          _
        %s174 = sand.u32 %s25, 1
        %s175 = scalar_lea.sflag [#allocation3], %s174
        %s176 = sand.u32 %s25, 1
        %s177 = smul.addr %s176, 104
        %s178 = scalar_lea.vmem [#allocation2], %s177
        %p179 = pneg %p38
        %p180 = pneg %p35
        %p181 = pneg %p59
        %p182 = pneg %p56
        %p183 = pneg %p80
        %p184 = pneg %p77
        %p185 = pneg %p106
        %p186 = pneg %p103
        %s187 = sand.u32 %s93, 1
        %s188 = sand.u32 %s93, 1
        %s189 = smul.addr %s188, 104
        %s190 = scalar_lea.vmem [#allocation4], %s189
        %s191 = smul.u32 13, %s17
        %s192 = ssub.s32 25, %s191
        %p193 = scmp.lt.s32.totalorder %s192, 13
        %s194 = scalar_select %p193, %s192, 13
        %s195 = smul.u32 128, %s194
        %s196 = smul.u32 13, %s17
        %s197 = ssub.s32 25, %s196
        %p198 = scmp.lt.s32.totalorder %s197, 13
        %s199 = scalar_select %p198, %s197, 13
        %s200 = smul.u32 128, %s199
        %v201 = vld [vmem:[%s169] sm:$0xff]
        %v202 = vld [vmem:[%s169 + $0x8] sm:$0xff]
        %v203 = vld [vmem:[%s169 + $0x10] sm:$0xff]
        %v204 = vld [vmem:[%s169 + $0x18] sm:$0xff]
        %v205 = vld [vmem:[%s169 + $0x20] sm:$0xff]
        %v206 = vld [vmem:[%s169 + $0x28] sm:$0xff]
        %v207 = vld [vmem:[%s169 + $0x30] sm:$0xff]
        %v208 = vld [vmem:[%s169 + $0x38] sm:$0xff]
        %v209 = vld [vmem:[%s169 + $0x40] sm:$0xff]
        %v210 = vld [vmem:[%s169 + $0x48] sm:$0xff]
        %v211 = vld [vmem:[%s169 + $0x50] sm:$0xff]
        %v212 = vld [vmem:[%s169 + $0x58] sm:$0xff]
        %v213 = vld [vmem:[%s169 + $0x60] sm:$0xff]
        %v214 = vld [vmem:[%s1] sm:$0xff]
        %v215 = vld [vmem:[%s1 + $0x8] sm:$0xff]
        %v216 = vld [vmem:[%s1 + $0x10] sm:$0xff]
        %v217 = vld [vmem:[%s1 + $0x18] sm:$0xff]
        %v218 = vld [vmem:[%s1 + $0x20] sm:$0xff]
        %v219 = vld [vmem:[%s1 + $0x28] sm:$0xff]
        %v220 = vld [vmem:[%s1 + $0x30] sm:$0xff]
        %v221 = vld [vmem:[%s1 + $0x38] sm:$0xff]
        %v222 = vld [vmem:[%s1 + $0x40] sm:$0xff]
        %v223 = vld [vmem:[%s1 + $0x48] sm:$0xff]
        %v224 = vld [vmem:[%s1 + $0x50] sm:$0xff]
        %v225 = vld [vmem:[%s1 + $0x58] sm:$0xff]
        %v226 = vld [vmem:[%s1 + $0x60] sm:$0xff]
        %v227 = vld [vmem:[%s1 + $0x68] sm:$0xff]
        %v228 = vld [vmem:[%s1 + $0x70] sm:$0xff]
        %v229 = vld [vmem:[%s1 + $0x78] sm:$0xff]
        %v230 = vld [vmem:[%s2] sm:$0x1]
        %v232 = vlaneseq
        %v233 = vshrl.u32 %v232, 7
        %v234 = vsub.s32 0, %v233
        %v235 = vrot.slane %v230, %v234
        %237 = vmatprep.subr.mxu0 0.0
        %238 = vmatpush1.msra.mxu0 %v214
        %239 = vmatprep.subr.mxu0 0.0
        %240 = vmatpush1.msra.mxu0 %v215
        %241 = vmatprep.subr.mxu0 0.0
        %242 = vmatpush1.msra.mxu0 %v216
        %243 = vmatprep.subr.mxu0 0.0
        %244 = vmatpush1.msra.mxu0 %v217
        %245 = vmatprep.subr.mxu0 0.0
        %246 = vmatpush1.msra.mxu0 %v218
        %247 = vmatprep.subr.mxu0 0.0
        %248 = vmatpush1.msra.mxu0 %v219
        %249 = vmatprep.subr.mxu0 0.0
        %250 = vmatpush1.msra.mxu0 %v220
        %251 = vmatprep.subr.mxu0 0.0
        %252 = vmatpush1.msra.mxu0 %v221
        %253 = vmatprep.subr.mxu0 0.0
        %254 = vmatpush1.msra.mxu0 %v222
        %255 = vmatprep.subr.mxu0 0.0
        %256 = vmatpush1.msra.mxu0 %v223
        %257 = vmatprep.subr.mxu0 0.0
        %258 = vmatpush1.msra.mxu0 %v224
        %259 = vmatprep.subr.mxu0 0.0
        %260 = vmatpush1.msra.mxu0 %v225
        %261 = vmatprep.subr.mxu0 0.0
        %262 = vmatpush1.msra.mxu0 %v226
        %263 = vmatprep.subr.mxu0 0.0
        %264 = vmatpush1.msra.mxu0 %v227
        %265 = vmatprep.subr.mxu0 0.0
        %266 = vmatpush1.msra.mxu0 %v228
        %267 = vmatprep.subr.mxu0 0.0
        %268 = vmatpush1.msra.mxu0 %v229
        %269 = vmatprep.subr.mxu0 0.0
        %270 = vmatpush1.msra.mxu0 0.0
        %271 = vmatprep.subr.mxu0 0.0
        %272 = vmatpush1.msra.mxu0 0.0
        %273 = vmatprep.subr.mxu0 0.0
        %274 = vmatpush1.msra.mxu0 0.0
        %275 = vmatprep.subr.mxu0 0.0
        %276 = vmatpush1.msra.mxu0 0.0
        %277 = vmatprep.subr.mxu0 0.0
        %278 = vmatpush1.msra.mxu0 0.0
        %279 = vmatprep.subr.mxu0 0.0
        %280 = vmatpush1.msra.mxu0 0.0
        %281 = vmatprep.subr.mxu0 0.0
        %282 = vmatpush1.msra.mxu0 0.0
        %283 = vmatprep.subr.mxu0 0.0
        %284 = vmatpush1.msra.mxu0 0.0
        %285 = vmatprep.subr.mxu0 0.0
        %286 = vmatpush1.msra.mxu0 0.0
        %287 = vmatprep.subr.mxu0 0.0
        %288 = vmatpush1.msra.mxu0 0.0
        %289 = vmatprep.subr.mxu0 0.0
        %290 = vmatpush1.msra.mxu0 0.0
        %291 = vmatprep.subr.mxu0 0.0
        %292 = vmatpush1.msra.mxu0 0.0
        %293 = vmatprep.subr.mxu0 0.0
        %294 = vmatpush1.msra.mxu0 0.0
        %295 = vmatprep.subr.mxu0 0.0
        %296 = vmatpush1.msra.mxu0 0.0
        %297 = vmatprep.subr.mxu0 0.0
        %298 = vmatpush1.msra.mxu0 0.0
        %299 = vmatprep.subr.mxu0 0.0
        %300 = vmatpush1.msra.mxu0 0.0
        %301 = vmatprep.mubr.f32.mxu0 0.0
        %302 = vmatmul.mubr.f32.gmra.mrb[0].mxu0 %v201
        %v303 = vpop.f32.mrb[0].mxu0
        %v304 = vadd.f32 %v235, %v303
        %v305 = vpop.f32.mrb[0].mxu0
        %306 = vmatprep.mubr.f32.mxu0 0.0
        %307 = vmatmul.mubr.f32.gmra.mrb[0].mxu0 %v202
        %v308 = vpop.f32.mrb[0].mxu0
        %v309 = vadd.f32 %v235, %v308
        %v310 = vpop.f32.mrb[0].mxu0
        %311 = vmatprep.mubr.f32.mxu0 0.0
        %312 = vmatmul.mubr.f32.gmra.mrb[0].mxu0 %v203
        %v313 = vpop.f32.mrb[0].mxu0
        %v314 = vadd.f32 %v235, %v313
        %v315 = vpop.f32.mrb[0].mxu0
        %316 = vmatprep.mubr.f32.mxu0 0.0
        %317 = vmatmul.mubr.f32.gmra.mrb[0].mxu0 %v204
        %v318 = vpop.f32.mrb[0].mxu0
        %v319 = vadd.f32 %v235, %v318
        %v320 = vpop.f32.mrb[0].mxu0
        %321 = vmatprep.mubr.f32.mxu0 0.0
        %322 = vmatmul.mubr.f32.gmra.mrb[0].mxu0 %v205
        %v323 = vpop.f32.mrb[0].mxu0
        %v324 = vadd.f32 %v235, %v323
        %v325 = vpop.f32.mrb[0].mxu0
        %326 = vmatprep.mubr.f32.mxu0 0.0
        %327 = vmatmul.mubr.f32.gmra.mrb[0].mxu0 %v206
        %v328 = vpop.f32.mrb[0].mxu0
        %v329 = vadd.f32 %v235, %v328
        %v330 = vpop.f32.mrb[0].mxu0
        %331 = vmatprep.mubr.f32.mxu0 0.0
        %332 = vmatmul.mubr.f32.gmra.mrb[0].mxu0 %v207
        %v333 = vpop.f32.mrb[0].mxu0
        %v334 = vadd.f32 %v235, %v333
        %v335 = vpop.f32.mrb[0].mxu0
        %336 = vmatprep.mubr.f32.mxu0 0.0
        %337 = vmatmul.mubr.f32.gmra.mrb[0].mxu0 %v208
        %v338 = vpop.f32.mrb[0].mxu0
        %v339 = vadd.f32 %v235, %v338
        %v340 = vpop.f32.mrb[0].mxu0
        %341 = vmatprep.mubr.f32.mxu0 0.0
        %342 = vmatmul.mubr.f32.gmra.mrb[0].mxu0 %v209
        %v343 = vpop.f32.mrb[0].mxu0
        %v344 = vadd.f32 %v235, %v343
        %v345 = vpop.f32.mrb[0].mxu0
        %346 = vmatprep.mubr.f32.mxu0 0.0
        %347 = vmatmul.mubr.f32.gmra.mrb[0].mxu0 %v210
        %v348 = vpop.f32.mrb[0].mxu0
        %v349 = vadd.f32 %v235, %v348
        %v350 = vpop.f32.mrb[0].mxu0
        %351 = vmatprep.mubr.f32.mxu0 0.0
        %352 = vmatmul.mubr.f32.gmra.mrb[0].mxu0 %v211
        %v353 = vpop.f32.mrb[0].mxu0
        %v354 = vadd.f32 %v235, %v353
        %v355 = vpop.f32.mrb[0].mxu0
        %356 = vmatprep.mubr.f32.mxu0 0.0
        %357 = vmatmul.mubr.f32.gmra.mrb[0].mxu0 %v212
        %v358 = vpop.f32.mrb[0].mxu0
        %v359 = vadd.f32 %v235, %v358
        %v360 = vpop.f32.mrb[0].mxu0
        %361 = vmatprep.mubr.f32.mxu0 0.0
        %362 = vmatmul.mubr.f32.gmra.mrb[0].mxu0 %v213
        %v363 = vpop.f32.mrb[0].mxu0
        %v364 = vadd.f32 %v235, %v363
        %v365 = vpop.f32.mrb[0].mxu0
        %366 = vdwg.mxu0
        %v367 = vxor.u32 %v304, 2147483648
        %v368 = vxor.u32 %v309, 2147483648
        %v369 = vxor.u32 %v314, 2147483648
        %v370 = vxor.u32 %v319, 2147483648
        %v371 = vxor.u32 %v324, 2147483648
        %v372 = vxor.u32 %v329, 2147483648
        %v373 = vxor.u32 %v334, 2147483648
        %v374 = vxor.u32 %v339, 2147483648
        %v375 = vxor.u32 %v344, 2147483648
        %v376 = vxor.u32 %v349, 2147483648
        %v377 = vxor.u32 %v354, 2147483648
        %v378 = vxor.u32 %v359, 2147483648
        %v379 = vxor.u32 %v364, 2147483648
        %v380 = vmul.f32 %v367, 1.442695
        %v381 = vpow.pop %v380
        %v382 = vmul.f32 %v368, 1.442695
        %v383 = vpow.pop %v382
        %v384 = vmul.f32 %v369, 1.442695
        %v385 = vpow.pop %v384
        %v386 = vmul.f32 %v370, 1.442695
        %v387 = vpow.pop %v386
        %v388 = vmul.f32 %v371, 1.442695
        %v389 = vpow.pop %v388
        %v390 = vmul.f32 %v372, 1.442695
        %v391 = vpow.pop %v390
        %v392 = vmul.f32 %v373, 1.442695
        %v393 = vpow.pop %v392
        %v394 = vmul.f32 %v374, 1.442695
        %v395 = vpow.pop %v394
        %v396 = vmul.f32 %v375, 1.442695
        %v397 = vpow.pop %v396
        %v398 = vmul.f32 %v376, 1.442695
        %v399 = vpow.pop %v398
        %v400 = vmul.f32 %v377, 1.442695
        %v401 = vpow.pop %v400
        %v402 = vmul.f32 %v378, 1.442695
        %v403 = vpow.pop %v402
        %v404 = vmul.f32 %v379, 1.442695
        %v405 = vpow.pop %v404
        %v406 = vadd.f32 %v381, 1.0
        %v407 = vadd.f32 %v383, 1.0
        %v408 = vadd.f32 %v385, 1.0
        %v409 = vadd.f32 %v387, 1.0
        %v410 = vadd.f32 %v389, 1.0
        %v411 = vadd.f32 %v391, 1.0
        %v412 = vadd.f32 %v393, 1.0
        %v413 = vadd.f32 %v395, 1.0
        %v414 = vadd.f32 %v397, 1.0
        %v415 = vadd.f32 %v399, 1.0
        %v416 = vadd.f32 %v401, 1.0
        %v417 = vadd.f32 %v403, 1.0
        %v418 = vadd.f32 %v405, 1.0
        %v419 = vrcp.pop %v406
        %v420 = vmul.f32 1.0, %v419
        %v421 = vrcp.pop %v407
        %v422 = vmul.f32 1.0, %v421
        %v423 = vrcp.pop %v408
        %v424 = vmul.f32 1.0, %v423
        %v425 = vrcp.pop %v409
        %v426 = vmul.f32 1.0, %v425
        %v427 = vrcp.pop %v410
        %v428 = vmul.f32 1.0, %v427
        %v429 = vrcp.pop %v411
        %v430 = vmul.f32 1.0, %v429
        %v431 = vrcp.pop %v412
        %v432 = vmul.f32 1.0, %v431
        %v433 = vrcp.pop %v413
        %v434 = vmul.f32 1.0, %v433
        %v435 = vrcp.pop %v414
        %v436 = vmul.f32 1.0, %v435
        %v437 = vrcp.pop %v415
        %v438 = vmul.f32 1.0, %v437
        %v439 = vrcp.pop %v416
        %v440 = vmul.f32 1.0, %v439
        %v441 = vrcp.pop %v417
        %v442 = vmul.f32 1.0, %v441
        %v443 = vrcp.pop %v418
        %v444 = vmul.f32 1.0, %v443
        %vm445 = vcmask 130048
        %446 = vst.msk [vmem:[%s190] sm:$0xff] %vm445, %v420
        %447 = vst.msk [vmem:[%s190 + $0x8] sm:$0xff] %vm445, %v422
        %448 = vst.msk [vmem:[%s190 + $0x10] sm:$0xff] %vm445, %v424
        %449 = vst.msk [vmem:[%s190 + $0x18] sm:$0xff] %vm445, %v426
        %450 = vst.msk [vmem:[%s190 + $0x20] sm:$0xff] %vm445, %v428
        %451 = vst.msk [vmem:[%s190 + $0x28] sm:$0xff] %vm445, %v430
        %452 = vst.msk [vmem:[%s190 + $0x30] sm:$0xff] %vm445, %v432
        %453 = vst.msk [vmem:[%s190 + $0x38] sm:$0xff] %vm445, %v434
        %454 = vst.msk [vmem:[%s190 + $0x40] sm:$0xff] %vm445, %v436
        %455 = vst.msk [vmem:[%s190 + $0x48] sm:$0xff] %vm445, %v438
        %456 = vst.msk [vmem:[%s190 + $0x50] sm:$0xff] %vm445, %v440
        %457 = vst.msk [vmem:[%s190 + $0x58] sm:$0xff] %vm445, %v442
        %458 = vst.msk [vmem:[%s190 + $0x60] sm:$0xff] %vm445, %v444
        %s459 = sand.u32 %s93, 1
        %s460 = sand.u32 %s93, 1
        %s461 = smul.addr %s460, 104
        %s462 = scalar_lea.vmem [#allocation4], %s461
        // Predicated region
        $region37: #{tpu_custom_call.1} parent=31 // pred_check
          %p463 = pneg %p103
        $region38: #{tpu_custom_call.1} parent=31 // pred_check_branch
          %465 = sbr.rel (%p463) target = $region40
        $region39: #{tpu_custom_call.1} parent=31 // pred_region
          %s466 = smul.u32 13, %s17
          %s467 = ssub.s32 25, %s466
          %p468 = scmp.lt.s32.totalorder %s467, 13
          %s469 = scalar_select %p468, %s467, 13
          %s470 = smul.u32 128, %s469
          %p471 = scmp.ne.s32.totalorder 0, %s470
          %s472 = smul.addr %s466, 8
          %s473 = scalar_lea.vmem %s3, %s472
          // Predicated region
          $region41: #{tpu_custom_call.1} parent=39 // pred_check
            %p474 = pneg %p471
          $region42: #{tpu_custom_call.1} parent=39 // pred_check_branch
            %476 = sbr.rel (%p474) target = $region44
          $region43: #{tpu_custom_call.1} parent=39 // pred_region
            // Predicated region
            $region45: #{tpu_custom_call.1} parent=43 // pred_check
              _
            $region46: #{tpu_custom_call.1} parent=43 // pred_check_branch
              %478 = sbr.rel (0) target = $region48
            $region47: #{tpu_custom_call.1} parent=43 // pred_region
              // Predicated region
              $region67: #{tpu_custom_call.1} parent=47 // pred_check
                _
              $region68: #{tpu_custom_call.1} parent=47 // pred_check_branch
                %552 = sbr.rel (0) target = $region70
              $region69: #{tpu_custom_call.1} parent=47 // pred_region
                %s553 = sdiv.u32.pop %s469, 13
                %s554 = srem.u32.pop %s469, 13
                // While loop
                $region71: #{tpu_custom_call.1} parent=69 // loop_pre_header
                  _
                $region72: #{tpu_custom_call.1} parent=69 // loop_header
                  %s556 = sphi 0, %s558
                  %p557 = scmp.ge.s32.totalorder %s556, %s553
                  %s561 = sphi 0, %s592
                  %s562 = sphi %s462, %s595
                  %s563 = sphi %s473, %s596
                $region73: #{tpu_custom_call.1} parent=69 // loop_header_branch
                  %560 = sbr.rel (%p557) target = $region77
                $region74: #{tpu_custom_call.1} parent=69 // loop_body
                  %v564 = vld [vmem:[%s562] sm:$0xff]
                  %565 = vst [vmem:[%s563] sm:$0xff] %v564
                  %v566 = vld [vmem:[%s562 + $0x8] sm:$0xff]
                  %567 = vst [vmem:[%s563 + $0x8] sm:$0xff] %v566
                  %v568 = vld [vmem:[%s562 + $0x10] sm:$0xff]
                  %569 = vst [vmem:[%s563 + $0x10] sm:$0xff] %v568
                  %v570 = vld [vmem:[%s562 + $0x18] sm:$0xff]
                  %571 = vst [vmem:[%s563 + $0x18] sm:$0xff] %v570
                  %v572 = vld [vmem:[%s562 + $0x20] sm:$0xff]
                  %573 = vst [vmem:[%s563 + $0x20] sm:$0xff] %v572
                  %v574 = vld [vmem:[%s562 + $0x28] sm:$0xff]
                  %575 = vst [vmem:[%s563 + $0x28] sm:$0xff] %v574
                  %v576 = vld [vmem:[%s562 + $0x30] sm:$0xff]
                  %577 = vst [vmem:[%s563 + $0x30] sm:$0xff] %v576
                  %v578 = vld [vmem:[%s562 + $0x38] sm:$0xff]
                  %579 = vst [vmem:[%s563 + $0x38] sm:$0xff] %v578
                  %v580 = vld [vmem:[%s562 + $0x40] sm:$0xff]
                  %581 = vst [vmem:[%s563 + $0x40] sm:$0xff] %v580
                  %v582 = vld [vmem:[%s562 + $0x48] sm:$0xff]
                  %583 = vst [vmem:[%s563 + $0x48] sm:$0xff] %v582
                  %v584 = vld [vmem:[%s562 + $0x50] sm:$0xff]
                  %585 = vst [vmem:[%s563 + $0x50] sm:$0xff] %v584
                  %v586 = vld [vmem:[%s562 + $0x58] sm:$0xff]
                  %587 = vst [vmem:[%s563 + $0x58] sm:$0xff] %v586
                  %v588 = vld [vmem:[%s562 + $0x60] sm:$0xff]
                  %589 = vst [vmem:[%s563 + $0x60] sm:$0xff] %v588
                  %s590 = sadd.s32 1, %s561
                  %p591 = scmp.ge.s32.totalorder %s590, %s553
                  %s592 = scalar_select %p591, 0, %s590
                  %s593 = smul.u32 %s592, 104
                  %s594 = smul.u32 %s592, 104
                  %s595 = scalar_lea.vmem %s462, %s593 [#allocation4]
                  %s596 = scalar_lea.vmem %s473, %s594
                $region75: #{tpu_custom_call.1} parent=69 // loop_footer
                  %s558 = sadd.s32 %s556, 1
                $region76: #{tpu_custom_call.1} parent=69 // loop_footer_branch
                  %555 = sbr.rel target = $region72
                $region77: #{tpu_custom_call.1} parent=69 // loop_exit
                  _
                %s597 = sdiv.u32.pop %s469, 13
                %s598 = srem.u32.pop %s469, 13
                %s599 = smul.u32 %s597, 13
                %s600 = smul.u32 8, %s599
                %s601 = scalar_lea.vmem %s462, %s600 [#allocation4]
                %s602 = smul.u32 8, %s599
                %s603 = scalar_lea.vmem %s473, %s602
                // While loop
                $region78: #{tpu_custom_call.1} parent=69 // loop_pre_header
                  _
                $region79: #{tpu_custom_call.1} parent=69 // loop_header
                  %s605 = sphi 0, %s607
                  %p606 = scmp.ge.s32.totalorder %s605, %s598
                  %s610 = sphi 0, %s617
                  %s611 = sphi %s601, %s620
                  %s612 = sphi %s603, %s621
                $region80: #{tpu_custom_call.1} parent=69 // loop_header_branch
                  %609 = sbr.rel (%p606) target = $region84
                $region81: #{tpu_custom_call.1} parent=69 // loop_body
                  %v613 = vld [vmem:[%s611] sm:$0xff]
                  %614 = vst [vmem:[%s612] sm:$0xff] %v613
                  %s615 = sadd.s32 1, %s610
                  %p616 = scmp.ge.s32.totalorder %s615, %s598
                  %s617 = scalar_select %p616, 0, %s615
                  %s618 = smul.u32 %s617, 8
                  %s619 = smul.u32 %s617, 8
                  %s620 = scalar_lea.vmem %s601, %s618 [#allocation4]
                  %s621 = scalar_lea.vmem %s603, %s619
                $region82: #{tpu_custom_call.1} parent=69 // loop_footer
                  %s607 = sadd.s32 %s605, 1
                $region83: #{tpu_custom_call.1} parent=69 // loop_footer_branch
                  %604 = sbr.rel target = $region79
                $region84: #{tpu_custom_call.1} parent=69 // loop_exit
                  _
              $region70: #{tpu_custom_call.1} parent=47 // pred_fallthru
                _
              // Predicated region
              $region85: #{tpu_custom_call.1} parent=47 // pred_check
                _
              $region86: #{tpu_custom_call.1} parent=47 // pred_check_branch
                %623 = sbr.rel target = $region88
              $region87: #{tpu_custom_call.1} parent=47 // pred_region
                _
              $region88: #{tpu_custom_call.1} parent=47 // pred_fallthru
                _
            $region48: #{tpu_custom_call.1} parent=43 // pred_fallthru
              _
            // Predicated region
            $region49: #{tpu_custom_call.1} parent=43 // pred_check
              _
            $region50: #{tpu_custom_call.1} parent=43 // pred_check_branch
              %480 = sbr.rel target = $region52
            $region51: #{tpu_custom_call.1} parent=43 // pred_region
              %s482 = sdiv.u32.pop %s469, 13
              %s483 = srem.u32.pop %s469, 13
              // While loop
              $region53: #{tpu_custom_call.1} parent=51 // loop_pre_header
                _
              $region54: #{tpu_custom_call.1} parent=51 // loop_header
                %s485 = sphi 0, %s487
                %p486 = scmp.ge.s32.totalorder %s485, %s482
                %s490 = sphi 0, %s521
                %s491 = sphi %s462, %s524
                %s492 = sphi %s473, %s525
              $region55: #{tpu_custom_call.1} parent=51 // loop_header_branch
                %489 = sbr.rel (%p486) target = $region59
              $region56: #{tpu_custom_call.1} parent=51 // loop_body
                %v493 = vld [vmem:[%s491] sm:$0xff]
                %494 = vst [vmem:[%s492] sm:$0xff] %v493
                %v495 = vld [vmem:[%s491 + $0x8] sm:$0xff]
                %496 = vst [vmem:[%s492 + $0x8] sm:$0xff] %v495
                %v497 = vld [vmem:[%s491 + $0x10] sm:$0xff]
                %498 = vst [vmem:[%s492 + $0x10] sm:$0xff] %v497
                %v499 = vld [vmem:[%s491 + $0x18] sm:$0xff]
                %500 = vst [vmem:[%s492 + $0x18] sm:$0xff] %v499
                %v501 = vld [vmem:[%s491 + $0x20] sm:$0xff]
                %502 = vst [vmem:[%s492 + $0x20] sm:$0xff] %v501
                %v503 = vld [vmem:[%s491 + $0x28] sm:$0xff]
                %504 = vst [vmem:[%s492 + $0x28] sm:$0xff] %v503
                %v505 = vld [vmem:[%s491 + $0x30] sm:$0xff]
                %506 = vst [vmem:[%s492 + $0x30] sm:$0xff] %v505
                %v507 = vld [vmem:[%s491 + $0x38] sm:$0xff]
                %508 = vst [vmem:[%s492 + $0x38] sm:$0xff] %v507
                %v509 = vld [vmem:[%s491 + $0x40] sm:$0xff]
                %510 = vst [vmem:[%s492 + $0x40] sm:$0xff] %v509
                %v511 = vld [vmem:[%s491 + $0x48] sm:$0xff]
                %512 = vst [vmem:[%s492 + $0x48] sm:$0xff] %v511
                %v513 = vld [vmem:[%s491 + $0x50] sm:$0xff]
                %514 = vst [vmem:[%s492 + $0x50] sm:$0xff] %v513
                %v515 = vld [vmem:[%s491 + $0x58] sm:$0xff]
                %516 = vst [vmem:[%s492 + $0x58] sm:$0xff] %v515
                %v517 = vld [vmem:[%s491 + $0x60] sm:$0xff]
                %518 = vst [vmem:[%s492 + $0x60] sm:$0xff] %v517
                %s519 = sadd.s32 1, %s490
                %p520 = scmp.ge.s32.totalorder %s519, %s482
                %s521 = scalar_select %p520, 0, %s519
                %s522 = smul.u32 %s521, 104
                %s523 = smul.u32 %s521, 104
                %s524 = scalar_lea.vmem %s462, %s522 [#allocation4]
                %s525 = scalar_lea.vmem %s473, %s523
              $region57: #{tpu_custom_call.1} parent=51 // loop_footer
                %s487 = sadd.s32 %s485, 1
              $region58: #{tpu_custom_call.1} parent=51 // loop_footer_branch
                %484 = sbr.rel target = $region54
              $region59: #{tpu_custom_call.1} parent=51 // loop_exit
                _
              %s526 = sdiv.u32.pop %s469, 13
              %s527 = srem.u32.pop %s469, 13
              %s528 = smul.u32 %s526, 13
              %s529 = smul.u32 8, %s528
              %s530 = scalar_lea.vmem %s462, %s529 [#allocation4]
              %s531 = smul.u32 8, %s528
              %s532 = scalar_lea.vmem %s473, %s531
              // While loop
              $region60: #{tpu_custom_call.1} parent=51 // loop_pre_header
                _
              $region61: #{tpu_custom_call.1} parent=51 // loop_header
                %s534 = sphi 0, %s536
                %p535 = scmp.ge.s32.totalorder %s534, %s527
                %s539 = sphi 0, %s546
                %s540 = sphi %s530, %s549
                %s541 = sphi %s532, %s550
              $region62: #{tpu_custom_call.1} parent=51 // loop_header_branch
                %538 = sbr.rel (%p535) target = $region66
              $region63: #{tpu_custom_call.1} parent=51 // loop_body
                %v542 = vld [vmem:[%s540] sm:$0xff]
                %543 = vst [vmem:[%s541] sm:$0xff] %v542
                %s544 = sadd.s32 1, %s539
                %p545 = scmp.ge.s32.totalorder %s544, %s527
                %s546 = scalar_select %p545, 0, %s544
                %s547 = smul.u32 %s546, 8
                %s548 = smul.u32 %s546, 8
                %s549 = scalar_lea.vmem %s530, %s547 [#allocation4]
                %s550 = scalar_lea.vmem %s532, %s548
              $region64: #{tpu_custom_call.1} parent=51 // loop_footer
                %s536 = sadd.s32 %s534, 1
              $region65: #{tpu_custom_call.1} parent=51 // loop_footer_branch
                %533 = sbr.rel target = $region61
              $region66: #{tpu_custom_call.1} parent=51 // loop_exit
                _
            $region52: #{tpu_custom_call.1} parent=43 // pred_fallthru
              _
          $region44: #{tpu_custom_call.1} parent=39 // pred_fallthru
            _
          %624 = vnop
        $region40: #{tpu_custom_call.1} parent=31 // pred_fallthru
          _
      $region32: #{tpu_custom_call.1} parent=5 // pred_fallthru
        _
      %p625 = scmp.le.s32.totalorder 2, %s12
      // Predicated region
      $region89: #{tpu_custom_call.1} parent=5 // pred_check
        %p626 = pneg %p625
      $region90: #{tpu_custom_call.1} parent=5 // pred_check_branch
        %628 = sbr.rel (%p626) target = $region92
      $region91: #{tpu_custom_call.1} parent=5 // pred_region
        %s629 = ssub.s32 %s12, 2
        // Predicated region
        $region93: #{tpu_custom_call.1} parent=91 // pred_check
          %p630 = pneg %p109
        $region94: #{tpu_custom_call.1} parent=91 // pred_check_branch
          %632 = sbr.rel (%p630) target = $region96
        $region95: #{tpu_custom_call.1} parent=91 // pred_region
          %s633 = sand.u32 %s94, 1
          %s634 = sand.u32 %s94, 1
          %s635 = smul.addr %s634, 104
          %s636 = scalar_lea.vmem [#allocation4], %s635
        $region96: #{tpu_custom_call.1} parent=91 // pred_fallthru
          _
      $region92: #{tpu_custom_call.1} parent=5 // pred_fallthru
        _
    $region6: #{tpu_custom_call.1} parent=1 // loop_footer
      %s16 = sadd.s32 1, %s12
    $region7: #{tpu_custom_call.1} parent=1 // loop_footer_branch
      %11 = sbr.rel target = $region3
    $region8: #{tpu_custom_call.1} parent=1 // loop_exit
      _
    %637 = vsyncpa [#allocation3], 1
    %s638 = scalar_lea.sflag [#allocation3], 1
    %639 = vsyncpa %s638, 1

</llo_original>
